<compile_context>
chip_gen: v6e
topology: v6e:2x2x1
jax: 0.10.0
libtpu: 0.0.40
codegen_flags: <defaults>
</compile_context>

<pallas_src>
import functools
import math

import jax
import jax.numpy as jnp
from jax.experimental import pallas as pl
from jax.experimental.pallas import tpu as pltpu


_PALLAS_MIN_BYTES = 1 << 20         # below this, XLA's fused broadcast-add is already fine
_TARGET_BLOCK_BYTES = 4 << 20       # streaming-add sweet spot (>=85% of HBM roofline)
_BIG_TARGET_BLOCK_BYTES = 8 << 20   # on 128 MiB-VMEM parts (v5e/v6e) for very long S
_MIN_GRID_STEPS = 4                 # keep enough grid steps to feed v7x's 2 TensorCores
_MIN_BLOCK_BYTES = 256 << 10        # don't shrink blocks below this for step-count's sake
_MAX_BCAST_UNROLL = 16              # cap the in-kernel lane-concat unroll (fold * batch)


def _pe_add_kernel(x_ref, pe_ref, o_ref, *, num_batch, d_model, fold):
    """x_ref/o_ref: (tS, fold*B*D); pe_ref: (tS, fold*D).

    The pe lane-broadcast across the batch (and across folded rows) is built
    in-register from static lane slices + a lane-dim concatenate -- no VMEM
    scratch round-trip, so vst traffic is exactly the output block.
    """
    x = x_ref[...]
    pe = pe_ref[...]
    if fold == 1 and num_batch == 1:
        pe_wide = pe
    else:
        cols = []
        for j in range(fold):
            chunk = pe[:, j * d_model:(j + 1) * d_model]      # (tS, D)
            cols.extend([chunk] * num_batch)
        pe_wide = jnp.concatenate(cols, axis=-1)               # (tS, fold*B*D)
    o_ref[...] = x + pe_wide


def make_positional_encoding_table(d_model: int, max_len: int = 5000) -> jnp.ndarray:
    """Build the pe buffer exactly as the PyTorch __init__ does: (max_len, 1, d_model)."""
    position = jnp.arange(0, max_len, dtype=jnp.float32)[:, None]          # (max_len, 1)
    div_term = jnp.exp(
        jnp.arange(0, d_model, dtype=jnp.float32) * (-math.log(10000.0) / d_model))
    angles = position * div_term                                            # (max_len, d_model)
    pe = jnp.sin(angles) + jnp.cos(angles)      # pe += sin; pe += cos (TranAD construction)
    return pe.reshape(max_len, 1, d_model)


def _vmem_cap_bytes() -> int:
    """Scoped-VMEM cap: half of physical VMEM, never above 64 MiB.

    128 MiB parts (v5e/v6e) -> 64 MiB cap; 64 MiB parts (v7x) -> 32 MiB cap.
    """
    phys = 64 << 20
    try:
        info = pltpu.get_tpu_info()
        phys = int(getattr(info, "vmem_capacity_bytes", phys)) or phys
    except Exception:
        pass
    return int(min(phys // 2, 64 << 20))


def _sublane_pack(dtype) -> int:
    """Rows per packed sublane group: 8 for 4-byte, 16 for bf16, 32 for int8/fp8."""
    return max(8, 32 // jnp.dtype(dtype).itemsize)


def _choose_tile_s(s_rows: int, row_bytes: int, pack: int,
                   target_bytes: int, vmem_cap: int) -> int:
    """Rows per block: multiple of `pack`, ~target_bytes per x block, VMEM-safe,
    and (when possible) at least _MIN_GRID_STEPS grid steps for megacore."""
    if s_rows <= pack:
        return s_rows                        # single block == full dim (allowed)
    budget_rows = max(pack, (vmem_cap // 6) // max(row_bytes, 1))
    t = min(s_rows, max(pack, target_bytes // max(row_bytes, 1)), budget_rows)
    t -= t % pack
    t = max(t, pack)
    steps = -(-s_rows // t)
    if steps < _MIN_GRID_STEPS:
        cand = (s_rows // _MIN_GRID_STEPS) // pack * pack
        if cand >= pack and cand * row_bytes >= _MIN_BLOCK_BYTES:
            t = cand
    return t


def positional_encoding_forward(x, pe, pos=0, *, tile_s=None, force_pallas=False):
    """x: (S, B, D); pe: (max_len, 1, D); pos: Python int or traced int scalar.

    Returns x + pe[pos:pos+S] broadcast over batch (dropout = identity at
    inference). `tile_s` (if given) is in rows of the folded (S/fold, fold*B*D)
    layout.
    """
    S, B, D = x.shape
    max_len = pe.shape[0]

    # Bounds check only when pos is concrete (jax dynamic_slice clamps silently,
    # unlike the PyTorch slice).
    try:
        pos_static = int(pos)
    except Exception:
        pos_static = None
    if pos_static is not None and (pos_static < 0 or pos_static + S > max_len):
        raise ValueError(
            f"positional-encoding window [{pos_static}, {pos_static + S}) "
            f"out of range for max_len={max_len}")

    itemsize = jnp.dtype(x.dtype).itemsize
    pe2d = pe.reshape(max_len, D).astype(x.dtype)
    # One small (S, D) slice in the wrapper (1/B of x's traffic). Works for both
    # static and traced pos, so new pos values never retrace/recompile the kernel.
    pe_rows = jax.lax.dynamic_slice(pe2d, (pos, 0), (S, D))

    # Tiny inputs: let XLA fuse the broadcast-add into neighbouring ops instead.
    if not force_pallas and S * B * D * itemsize < _PALLAS_MIN_BYTES:
        return x + pe_rows[:, None, :]

    # ---- lane-dense layout ---------------------------------------------------
    # (S, B, D) -> (S/fold, fold*B*D). When B*D is not a multiple of 128, fold
    # `fold` consecutive sequence rows into the lane dim so the output store is a
    # full-width unmasked vst instead of a masked vst.msk.
    bd = B * D
    fold = 1
    if bd % 128 != 0:
        k = 128 // math.gcd(bd, 128)
        if S % k == 0 and k * B <= _MAX_BCAST_UNROLL:
            fold = k
    s_rows = S // fold
    lane = fold * bd

    x2d = x.reshape(s_rows, lane)                 # free row-major reshape
    pe2 = pe_rows.reshape(s_rows, fold * D)       # pe stays narrow in HBM
    row_bytes = lane * itemsize

    vmem_cap = _vmem_cap_bytes()
    pack = _sublane_pack(x.dtype)
    target = _BIG_TARGET_BLOCK_BYTES if vmem_cap >= (64 << 20) else _TARGET_BLOCK_BYTES

    if tile_s is not None:
        tS = min(int(tile_s), s_rows)
        if tS <= 0 or (tS % pack != 0 and tS != s_rows):
            raise ValueError(
                f"tile_s must be positive and a multiple of {pack} (or == {s_rows})")
    else:
        tS = _choose_tile_s(s_rows, row_bytes, pack, target, vmem_cap)

    grid = (pl.cdiv(s_rows, tS),)

    block_x_bytes = tS * lane * itemsize
    block_pe_bytes = tS * fold * D * itemsize
    # x in + out double-buffered, pe double-buffered, + slack. No scratch anymore.
    vmem_bytes = 4 * block_x_bytes + 2 * block_pe_bytes + (2 << 20)
    vmem_bytes = int(min(max(vmem_bytes, 4 << 20), vmem_cap))

    out2d = pl.pallas_call(
        functools.partial(_pe_add_kernel, num_batch=B, d_model=D, fold=fold),
        out_shape=jax.ShapeDtypeStruct((s_rows, lane), x.dtype),
        grid_spec=pltpu.PrefetchScalarGridSpec(
            num_scalar_prefetch=0,
            grid=grid,
            in_specs=[
                pl.BlockSpec((tS, lane), lambda i: (i, 0)),
                pl.BlockSpec((tS, fold * D), lambda i: (i, 0)),
            ],
            out_specs=pl.BlockSpec((tS, lane), lambda i: (i, 0)),
        ),
        compiler_params=pltpu.CompilerParams(
            dimension_semantics=("parallel",),   # shard the stream across v7x's 2 TCs
            vmem_limit_bytes=vmem_bytes,
        ),
    )(x2d, pe2)

    return out2d.reshape(S, B, D)


if __name__ == "__main__":
    fwd = jax.jit(positional_encoding_forward,
                  static_argnames=("tile_s", "force_pallas"))

    key = jax.random.PRNGKey(0)
    k1, k2 = jax.random.split(key)

    # Case 1: small spec-sized shape (S=8, B=2, D=32). B*D=64 -> lane-folding
    # path (fold=2, full 128-lane stores). Force the Pallas path.
    S1, B1, D1, MAX1, POS1 = 8, 2, 32, 64, 3
    x1 = jax.random.normal(k1, (S1, B1, D1), dtype=jnp.float32)
    pe1 = make_positional_encoding_table(D1, MAX1)
    ref1 = x1 + jax.lax.dynamic_slice(pe1, (POS1, 0, 0), (S1, 1, D1))

    out1 = jax.block_until_ready(fwd(x1, pe1, POS1, force_pallas=True))
    assert out1.shape == (S1, B1, D1)
    assert jnp.allclose(out1, ref1, atol=1e-6, rtol=1e-6)

    # Same small shape through the non-Pallas fallback (XLA fuses the add).
    out1b = jax.block_until_ready(fwd(x1, pe1, POS1))
    assert jnp.allclose(out1b, ref1, atol=1e-6, rtol=1e-6)

    # Case 2: lane-dense B*D = 128, multi-step pipelined grid, unaligned pos
    # (pos is a traced scalar -- no recompilation for new values).
    S2, B2, D2, MAX2, POS2 = 2048, 4, 32, 4096, 100
    x2 = jax.random.normal(k2, (S2, B2, D2), dtype=jnp.float32)
    pe2 = make_positional_encoding_table(D2, MAX2)
    ref2 = x2 + jax.lax.dynamic_slice(pe2, (POS2, 0, 0), (S2, 1, D2))

    out2 = jax.block_until_ready(fwd(x2, pe2, POS2))
    assert out2.shape == (S2, B2, D2)
    assert jnp.allclose(out2, ref2, atol=1e-6, rtol=1e-6)

    print("KERNEL_OK")
</pallas_src>

<mosaic_0001>
module attributes {stable_mosaic.version = 11 : i64} {
  func.func @_pe_add_kernel(%arg0: i32, %arg1: memref<4x128xf32, #tpu.memory_space<vmem>>, %arg2: memref<4x64xf32, #tpu.memory_space<vmem>>, %arg3: memref<4x128xf32, #tpu.memory_space<vmem>>) attributes {dimension_semantics = [#tpu.dimension_semantics<parallel>], iteration_bounds = array<i64: 1>, scalar_prefetch = 0 : i64, scratch_operands = 0 : i64, tpu.core_type = #tpu.core_type<tc>, window_params = [{transform_indices = @transform_0, window_bounds = array<i64: 4, 128>}, {transform_indices = @transform_1, window_bounds = array<i64: 4, 64>}, {transform_indices = @transform_2, window_bounds = array<i64: 4, 128>}]} {
    %c0 = arith.constant 0 : index
    %c0_0 = arith.constant 0 : index
    %0 = vector.load %arg1[%c0, %c0_0] : memref<4x128xf32, #tpu.memory_space<vmem>>, vector<4x128xf32>
    %c0_1 = arith.constant 0 : index
    %c0_2 = arith.constant 0 : index
    %1 = vector.load %arg2[%c0_1, %c0_2] : memref<4x64xf32, #tpu.memory_space<vmem>>, vector<4x64xf32>
    %2 = vector.extract_strided_slice %1 {offsets = [0, 0], sizes = [4, 32], strides = [1, 1]} : vector<4x64xf32> to vector<4x32xf32>
    %3 = vector.extract_strided_slice %1 {offsets = [0, 32], sizes = [4, 32], strides = [1, 1]} : vector<4x64xf32> to vector<4x32xf32>
    %4 = tpu.concatenate %2, %2, %3, %3 in 1 : vector<4x32xf32>, vector<4x32xf32>, vector<4x32xf32>, vector<4x32xf32> -> vector<4x128xf32>
    %5 = arith.addf %0, %4 : vector<4x128xf32>
    %c0_3 = arith.constant 0 : index
    %c0_4 = arith.constant 0 : index
    %6 = vector.load %arg3[%c0_3, %c0_4] : memref<4x128xf32, #tpu.memory_space<vmem>>, vector<4x128xf32>
    tpu.vector_store %arg3[%c0_3, %c0_4], %5 {strides = array<i32>} : memref<4x128xf32, #tpu.memory_space<vmem>>, vector<4x128xf32>,
    return
  }
  func.func @transform_0(%arg0: i32) -> (i32, i32) {
    %c0_i32 = arith.constant 0 : i32
    %c0_i32_0 = arith.constant 0 : i32
    return %arg0, %c0_i32 : i32, i32
  }
  func.func @transform_1(%arg0: i32) -> (i32, i32) {
    %c0_i32 = arith.constant 0 : i32
    %c0_i32_0 = arith.constant 0 : i32
    return %arg0, %c0_i32 : i32, i32
  }
  func.func @transform_2(%arg0: i32) -> (i32, i32) {
    %c0_i32 = arith.constant 0 : i32
    %c0_i32_0 = arith.constant 0 : i32
    return %arg0, %c0_i32 : i32, i32
  }
}

</mosaic_0001>

<llo_original>
// kernel: positional_encoding_forward.1
$region0: #{positional_encoding_forward.1}
  #allocation0 [shape = 'u32[]', space=smem, size = 0x4, offset = 0x4, fixed_abs, tag = 'smem constant byte address 0x4 - core index']
  #allocation1 [shape = 'u32[144,128]{1,0:T(1,128)}', space=vmem, size = 0x12000, scoped, tag = 'internal scratch']
  %s0 = inlined_call_operand.vmem [shape: f32[4,128], index: 0, kind: input, shape index: {}]
  %s1 = inlined_call_operand.vmem [shape: f32[4,64], index: 1, kind: input, shape index: {}]
  %s2 = inlined_call_operand.vmem [shape: f32[4,128], index: 2, kind: output, shape index: {}]
  %s3 = sld [smem:[#allocation0]]
  $region18: #{positional_encoding_forward.1} parent=0
    _
  %s5 = ssub.s32 1, %s3
  %s6 = scalar_select 0, %s5, %s3
  // Predicated region
  $region2: #{positional_encoding_forward.1} parent=0 // pred_check
    _
  $region3: #{positional_encoding_forward.1} parent=0 // pred_check_branch
    %8 = sbr.rel (0) target = $region5
  $region4: #{positional_encoding_forward.1} parent=0 // pred_region
    _
  $region5: #{positional_encoding_forward.1} parent=0 // pred_fallthru
    _
  // Predicated region
  $region6: #{positional_encoding_forward.1} parent=0 // pred_check
    _
  $region7: #{positional_encoding_forward.1} parent=0 // pred_check_branch
    %10 = sbr.rel (0) target = $region9
  $region8: #{positional_encoding_forward.1} parent=0 // pred_region
    _
  $region9: #{positional_encoding_forward.1} parent=0 // pred_fallthru
    _
  %v11 = vld [vmem:[%s0] sm:$0xf]
  %v12 = vld [vmem:[%s1] sm:$0xf]
  %14 = vrot.lane.b32.xlu0 %v12, 32
  %v15 = vpop.permute.xlu0 %14
  %17 = vrot.lane.b32.xlu0 %v12, 64
  %v18 = vpop.permute.xlu0 %17
  %vm20 = vcmask 261120
  %v21 = vsel %vm20, %v12, %v15
  %vm22 = vcmask 523264
  %v23 = vsel %vm22, %v21, %v15
  %vm24 = vcmask 785408
  %v25 = vsel %vm24, %v23, %v18
  %v26 = vadd.f32 %v11, %v25
  %27 = vst [vmem:[%s2] sm:$0xf] %v26
  // Predicated region
  $region10: #{positional_encoding_forward.1} parent=0 // pred_check
    _
  $region11: #{positional_encoding_forward.1} parent=0 // pred_check_branch
    %29 = sbr.rel (0) target = $region13
  $region12: #{positional_encoding_forward.1} parent=0 // pred_region
    _
  $region13: #{positional_encoding_forward.1} parent=0 // pred_fallthru
    _
  // Predicated region
  $region14: #{positional_encoding_forward.1} parent=0 // pred_check
    _
  $region15: #{positional_encoding_forward.1} parent=0 // pred_check_branch
    %31 = sbr.rel (0) target = $region17
  $region16: #{positional_encoding_forward.1} parent=0 // pred_region
    _
  $region17: #{positional_encoding_forward.1} parent=0 // pred_fallthru
    _

</llo_original>
